<compile_context>
chip_gen: v7x
topology: tpu7x:2x2x1
jax: 0.10.0
libtpu: 0.0.40
codegen_flags: <defaults>
</compile_context>

<pallas_src>
import functools

import jax
import jax.numpy as jnp
from jax.experimental import pallas as pl
from jax.experimental.pallas import tpu as pltpu


def _concat_pool_kernel(x_ref, o_ref, sum_ref, max_ref, *, t_tile, t_total,
                        time_last):
    """Grid (b, c, k).  NCW: x_ref (bt, ct, tt); NWC: x_ref (bt, tt, ct).
    o_ref: (bt, 3, ct).  sum_ref / max_ref: (bt, ct) f32 running accumulators."""
    k = pl.program_id(2)
    n_t = pl.num_programs(2)
    t_axis = 2 if time_last else 1

    num_t = -(-t_total // t_tile)                   # static python int
    rem = t_total - (num_t - 1) * t_tile            # static: valid T in last tile

    @pl.when(k == 0)
    def _init():
        sum_ref[...] = jnp.zeros(sum_ref.shape, sum_ref.dtype)
        max_ref[...] = jnp.full(max_ref.shape, -jnp.inf, dtype=max_ref.dtype)

    x = x_ref[...].astype(jnp.float32)              # f32 working set (accum width)

    def _accumulate(x_sum, x_max):
        sum_ref[...] += jnp.sum(x_sum, axis=t_axis)
        max_ref[...] = jnp.maximum(max_ref[...], jnp.max(x_max, axis=t_axis))

    if rem == t_tile:
        # T divides evenly into tiles: never any masking.
        _accumulate(x, x)
    else:
        # Only the final T tile is partial: gate the mask to it.
        @pl.when(k < n_t - 1)
        def _full_tiles():
            _accumulate(x, x)

        @pl.when(k == n_t - 1)
        def _partial_tile():
            t_idx = jax.lax.broadcasted_iota(jnp.int32, x.shape, t_axis)
            valid = t_idx < rem
            _accumulate(jnp.where(valid, x, 0.0), jnp.where(valid, x, -jnp.inf))

    @pl.when(k == n_t - 1)
    def _finalize():
        local_last = (t_total - 1) % t_tile         # static; always within `rem`
        t_idx = jax.lax.broadcasted_iota(jnp.int32, x.shape, t_axis)
        last = jnp.max(jnp.where(t_idx == local_last, x, -jnp.inf), axis=t_axis)
        inv_t = jnp.float32(1.0 / t_total)          # mean = sum * (1/T)
        o_ref[:, 0, :] = (sum_ref[...] * inv_t).astype(o_ref.dtype)   # avg pool
        o_ref[:, 1, :] = max_ref[...].astype(o_ref.dtype)             # max pool
        o_ref[:, 2, :] = last.astype(o_ref.dtype)                     # last step


def _pick_tiles(B, C, T, *, time_last):
    """Pick (b_tile, c_tile, t_tile).

    * c_tile: full C when C <= 128; otherwise 128-lane chunks (bounds VMEM for
      huge C and gives the 'parallel' C axis >= 2 blocks for v7x megacore).
    * b_tile: min(B, 8); shrunk so n_b >= 2 when neither B nor C splits.
    * t_tile: largest aligned chunk of the reduction axis whose f32 working set
      fits the per-tile budget (budgeted at accumulation width, not input
      dtype).  Alignment: 128 (lanes) for NCW, 8 (sublanes) for NWC.
    """
    f32_tile_budget = 4 * 1024 * 1024
    try:
        # v5e/v6e have 128 MiB physical VMEM -> afford bigger tiles; v7x (64 MiB)
        # stays at the conservative budget.
        if pltpu.get_tpu_info().vmem_capacity_bytes >= 100 * 1024 * 1024:
            f32_tile_budget = 8 * 1024 * 1024
    except Exception:
        pass

    c_tile = C if C <= 128 else 128

    b_tile = min(B, 8)
    if B >= 2 and pl.cdiv(B, b_tile) == 1 and pl.cdiv(C, c_tile) == 1:
        # Neither axis would split -> halve B so a "parallel" axis has 2 blocks.
        b_tile = (B + 1) // 2

    t_align = 128 if time_last else 8
    budget_elems = f32_tile_budget // 4
    max_t = budget_elems // max(1, b_tile * c_tile)
    t_tile = max(t_align, (max_t // t_align) * t_align)
    if t_tile >= T:
        t_tile = T                                  # full-dim block is always legal
    return b_tile, c_tile, t_tile


def adaptive_concat_pool_rnn(x, bidirectional=False, *, channels_last=False,
                             b_tile=None, c_tile=None, t_tile=None):
    """AdaptiveConcatPoolRNN forward.

    Args:
      x: (B, C, T) array (PyTorch NCW) or (B, T, C) if channels_last=True.
         Both layouts are consumed natively -- no wrapper transpose.
      bidirectional: accepted for API parity.  The PyTorch reference's
        bidirectional branch slices x[:, C:, 0] with C = x.size(1) (empty), so
        it degenerates to x[:, :, -1]; we reproduce that, hence no effect.
        # TODO(synk): confirm the empty-slice behaviour of the PyTorch module
        # is intended; if "last fwd + first bwd step" was meant, both differ.
      channels_last: set True if x is already (B, T, C) (RNN-native layout).
      b_tile / c_tile / t_tile: optional overrides (testing / tuning).  If
        given, c_tile must be a multiple of 128 or equal C; t_tile must be a
        multiple of 128 (NCW) / 8 (channels_last) or equal T.

    Returns:
      (B, 3*C) = concat([mean_T, max_T, last_T], axis=1).
    """
    del bidirectional  # see docstring
    if channels_last:
        B, T, C = x.shape
        time_last = False
    else:
        B, C, T = x.shape
        time_last = True

    bt, ct, tt = _pick_tiles(B, C, T, time_last=time_last)
    if b_tile is not None:
        bt = b_tile
    if c_tile is not None:
        ct = c_tile
    if t_tile is not None:
        tt = t_tile
    bt, ct, tt = min(bt, B), min(ct, C), min(tt, T)

    n_b, n_c, n_t = pl.cdiv(B, bt), pl.cdiv(C, ct), pl.cdiv(T, tt)

    kernel = functools.partial(_concat_pool_kernel, t_tile=tt, t_total=T,
                               time_last=time_last)

    if time_last:                                   # NCW: (B, C, T)
        in_block = (bt, ct, tt)
        in_map = lambda b, c, k: (b, c, k)
    else:                                           # NWC: (B, T, C)
        in_block = (bt, tt, ct)
        in_map = lambda b, c, k: (b, k, c)

    bytes_accessed = int(x.size) * x.dtype.itemsize + B * 3 * C * x.dtype.itemsize

    pooled = pl.pallas_call(
        kernel,
        out_shape=jax.ShapeDtypeStruct((B, 3, C), x.dtype),
        grid_spec=pltpu.PrefetchScalarGridSpec(
            num_scalar_prefetch=0,
            grid=(n_b, n_c, n_t),
            in_specs=[pl.BlockSpec(in_block, in_map)],
            out_specs=pl.BlockSpec((bt, 3, ct), lambda b, c, k: (b, 0, c)),
            scratch_shapes=[
                pltpu.VMEM((bt, ct), jnp.float32),   # running sum
                pltpu.VMEM((bt, ct), jnp.float32),   # running max
            ],
        ),
        compiler_params=pltpu.CompilerParams(
            dimension_semantics=("parallel", "parallel", "arbitrary"),
            vmem_limit_bytes=32 * 1024 * 1024,
        ),
        cost_estimate=pl.CostEstimate(
            flops=2 * int(x.size),                   # sum + max comparisons
            transcendentals=0,
            bytes_accessed=int(bytes_accessed),
        ),
    )(x)

    # Lane-dense (B, 3, C) -> (B, 3C); matches concat([avg, max, last], dim=1).
    return pooled.reshape(B, 3 * C)


def _reference(x_bct):
    avg = jnp.mean(x_bct, axis=-1)
    mx = jnp.max(x_bct, axis=-1)
    last = x_bct[:, :, -1]
    return jnp.concatenate([avg, mx, last], axis=1)


if __name__ == "__main__":
    key = jax.random.PRNGKey(0)
    k1, k2, k3, k4, k5 = jax.random.split(key, 5)

    # Case 1: module-spec toy shape, NCW (PyTorch layout), single T block.
    B, C, T = 2, 4, 16
    x1 = jax.random.normal(k1, (B, C, T), dtype=jnp.float32)
    out1 = jax.block_until_ready(adaptive_concat_pool_rnn(x1, bidirectional=False))
    assert out1.shape == (B, 3 * C), out1.shape
    assert jnp.allclose(out1, _reference(x1), atol=1e-5, rtol=1e-5), "case1 mismatch"

    # Case 2: NCW multi-step T reduction with a masked partial last tile.
    x2 = jax.random.normal(k2, (2, 4, 200), dtype=jnp.float32)
    out2 = jax.block_until_ready(adaptive_concat_pool_rnn(x2, t_tile=128))
    assert jnp.allclose(out2, _reference(x2), atol=1e-5, rtol=1e-5), "case2 mismatch"

    # Case 3: channels-last (B, T, C) path, multi-step T with partial last tile.
    x3 = jax.random.normal(k3, (3, 20, 8), dtype=jnp.float32)      # (B, T, C)
    out3 = jax.block_until_ready(
        adaptive_concat_pool_rnn(x3, channels_last=True, t_tile=8))
    ref3 = _reference(jnp.swapaxes(x3, 1, 2))
    assert jnp.allclose(out3, ref3, atol=1e-5, rtol=1e-5), "case3 mismatch"

    # Case 4: C > 128 -> tiled C ('parallel' axis with 2 blocks, partial C block);
    # also exercises the (no-op) bidirectional flag.
    x4 = jax.random.normal(k4, (2, 192, 64), dtype=jnp.float32)
    out4 = jax.block_until_ready(adaptive_concat_pool_rnn(x4, bidirectional=True))
    assert jnp.allclose(out4, _reference(x4), atol=1e-5, rtol=1e-5), "case4 mismatch"

    # Case 5: bf16 input, f32 accumulation, masked partial T tile.
    x5 = jax.random.normal(k5, (4, 16, 200), dtype=jnp.bfloat16)
    out5 = jax.block_until_ready(adaptive_concat_pool_rnn(x5, t_tile=128))
    ref5 = _reference(x5.astype(jnp.float32))
    assert jnp.allclose(out5.astype(jnp.float32), ref5, atol=2e-2, rtol=2e-2), \
        "case5 mismatch"

    print("KERNEL_OK")
</pallas_src>

<mosaic_0001>
module attributes {stable_mosaic.version = 11 : i64} {
  func.func @_concat_pool_kernel(%arg0: i32, %arg1: i32, %arg2: i32, %arg3: memref<1x4x16xf32, #tpu.memory_space<vmem>>, %arg4: memref<1x3x4xf32, #tpu.memory_space<vmem>>, %arg5: memref<1x4xf32, #tpu.memory_space<vmem>>, %arg6: memref<1x4xf32, #tpu.memory_space<vmem>>) attributes {dimension_semantics = [#tpu.dimension_semantics<parallel>, #tpu.dimension_semantics<parallel>, #tpu.dimension_semantics<arbitrary>], iteration_bounds = array<i64: 2, 1, 1>, scalar_prefetch = 0 : i64, scratch_operands = 2 : i64, tpu.core_type = #tpu.core_type<tc>, window_params = [{transform_indices = @transform_0, window_bounds = array<i64: 1, 4, 16>}, {transform_indices = @transform_1, window_bounds = array<i64: 1, 3, 4>}]} {
    %c0_i32 = arith.constant 0 : i32
    %0 = arith.cmpi eq, %arg2, %c0_i32 : i32
    %1 = arith.extui %0 : i1 to i32
    %c0_i32_0 = arith.constant 0 : i32
    %2 = arith.cmpi ne, %1, %c0_i32_0 : i32
    scf.if %2 {
      %cst_14 = arith.constant 0.000000e+00 : f32
      %15 = vector.broadcast %cst_14 : f32 to vector<1x4xf32>
      %c0_15 = arith.constant 0 : index
      %c0_16 = arith.constant 0 : index
      %16 = vector.load %arg5[%c0_15, %c0_16] : memref<1x4xf32, #tpu.memory_space<vmem>>, vector<1x4xf32>
      tpu.vector_store %arg5[%c0_15, %c0_16], %15 {strides = array<i32>} : memref<1x4xf32, #tpu.memory_space<vmem>>, vector<1x4xf32>,
      %cst_17 = arith.constant 0xFF800000 : f32
      %17 = vector.broadcast %cst_17 : f32 to vector<1x4xf32>
      %c0_18 = arith.constant 0 : index
      %c0_19 = arith.constant 0 : index
      %18 = vector.load %arg6[%c0_18, %c0_19] : memref<1x4xf32, #tpu.memory_space<vmem>>, vector<1x4xf32>
      tpu.vector_store %arg6[%c0_18, %c0_19], %17 {strides = array<i32>} : memref<1x4xf32, #tpu.memory_space<vmem>>, vector<1x4xf32>,
    } else {
    }
    %c0 = arith.constant 0 : index
    %c0_1 = arith.constant 0 : index
    %c0_2 = arith.constant 0 : index
    %3 = vector.load %arg3[%c0, %c0_1, %c0_2] : memref<1x4x16xf32, #tpu.memory_space<vmem>>, vector<1x4x16xf32>
    %c0_3 = arith.constant 0 : index
    %c0_4 = arith.constant 0 : index
    %4 = vector.load %arg5[%c0_3, %c0_4] : memref<1x4xf32, #tpu.memory_space<vmem>>, vector<1x4xf32>
    %cst = arith.constant dense<0.000000e+00> : vector<1x4xf32>
    %5 = vector.multi_reduction <add>, %3, %cst [2] : vector<1x4x16xf32> to vector<1x4xf32>
    %6 = arith.addf %4, %5 : vector<1x4xf32>
    %c0_5 = arith.constant 0 : index
    %c0_6 = arith.constant 0 : index
    %7 = vector.load %arg5[%c0_5, %c0_6] : memref<1x4xf32, #tpu.memory_space<vmem>>, vector<1x4xf32>
    tpu.vector_store %arg5[%c0_5, %c0_6], %6 {strides = array<i32>} : memref<1x4xf32, #tpu.memory_space<vmem>>, vector<1x4xf32>,
    %c0_7 = arith.constant 0 : index
    %c0_8 = arith.constant 0 : index
    %8 = vector.load %arg6[%c0_7, %c0_8] : memref<1x4xf32, #tpu.memory_space<vmem>>, vector<1x4xf32>
    %cst_9 = arith.constant dense<0xFF800000> : vector<1x4xf32>
    %9 = vector.multi_reduction <maximumf>, %3, %cst_9 [2] : vector<1x4x16xf32> to vector<1x4xf32>
    %10 = arith.maximumf %8, %9 : vector<1x4xf32>
    %c0_10 = arith.constant 0 : index
    %c0_11 = arith.constant 0 : index
    %11 = vector.load %arg6[%c0_10, %c0_11] : memref<1x4xf32, #tpu.memory_space<vmem>>, vector<1x4xf32>
    tpu.vector_store %arg6[%c0_10, %c0_11], %10 {strides = array<i32>} : memref<1x4xf32, #tpu.memory_space<vmem>>, vector<1x4xf32>,
    %c0_i32_12 = arith.constant 0 : i32
    %12 = arith.cmpi eq, %arg2, %c0_i32_12 : i32
    %13 = arith.extui %12 : i1 to i32
    %c0_i32_13 = arith.constant 0 : i32
    %14 = arith.cmpi ne, %13, %c0_i32_13 : i32
    scf.if %14 {
      %15 = tpu.iota {dimensions = array<i32: 2>} : vector<1x4x16xi32>
      %c15_i32 = arith.constant 15 : i32
      %16 = vector.broadcast %c15_i32 : i32 to vector<1x4x16xi32>
      %17 = arith.cmpi eq, %15, %16 : vector<1x4x16xi32>
      %cst_14 = arith.constant 0xFF800000 : f32
      %18 = vector.broadcast %cst_14 : f32 to vector<1x4x16xf32>
      %19 = arith.select %17, %3, %18 : vector<1x4x16xi1>, vector<1x4x16xf32>
      %cst_15 = arith.constant dense<0xFF800000> : vector<1x4xf32>
      %20 = vector.multi_reduction <maximumf>, %19, %cst_15 [2] : vector<1x4x16xf32> to vector<1x4xf32>
      %c0_16 = arith.constant 0 : index
      %c0_17 = arith.constant 0 : index
      %21 = vector.load %arg5[%c0_16, %c0_17] : memref<1x4xf32, #tpu.memory_space<vmem>>, vector<1x4xf32>
      %cst_18 = arith.constant 6.250000e-02 : f32
      %22 = vector.broadcast %cst_18 : f32 to vector<1x4xf32>
      %23 = arith.mulf %21, %22 : vector<1x4xf32>
      %c0_19 = arith.constant 0 : index
      %c0_20 = arith.constant 0 : index
      %c0_21 = arith.constant 0 : index
      %24 = vector.load %arg4[%c0_19, %c0_20, %c0_21] : memref<1x3x4xf32, #tpu.memory_space<vmem>>, vector<1x1x4xf32>
      %25 = vector.shape_cast %24 : vector<1x1x4xf32> to vector<1x4xf32>
      %26 = vector.shape_cast %23 : vector<1x4xf32> to vector<1x1x4xf32>
      tpu.vector_store %arg4[%c0_19, %c0_20, %c0_21], %26 {strides = array<i32>} : memref<1x3x4xf32, #tpu.memory_space<vmem>>, vector<1x1x4xf32>,
      %c0_22 = arith.constant 0 : index
      %c0_23 = arith.constant 0 : index
      %27 = vector.load %arg6[%c0_22, %c0_23] : memref<1x4xf32, #tpu.memory_space<vmem>>, vector<1x4xf32>
      %c0_24 = arith.constant 0 : index
      %c1 = arith.constant 1 : index
      %c0_25 = arith.constant 0 : index
      %28 = vector.load %arg4[%c0_24, %c1, %c0_25] : memref<1x3x4xf32, #tpu.memory_space<vmem>>, vector<1x1x4xf32>
      %29 = vector.shape_cast %28 : vector<1x1x4xf32> to vector<1x4xf32>
      %30 = vector.shape_cast %27 : vector<1x4xf32> to vector<1x1x4xf32>
      tpu.vector_store %arg4[%c0_24, %c1, %c0_25], %30 {strides = array<i32>} : memref<1x3x4xf32, #tpu.memory_space<vmem>>, vector<1x1x4xf32>,
      %c0_26 = arith.constant 0 : index
      %c2 = arith.constant 2 : index
      %c0_27 = arith.constant 0 : index
      %31 = vector.load %arg4[%c0_26, %c2, %c0_27] : memref<1x3x4xf32, #tpu.memory_space<vmem>>, vector<1x1x4xf32>
      %32 = vector.shape_cast %31 : vector<1x1x4xf32> to vector<1x4xf32>
      %33 = vector.shape_cast %20 : vector<1x4xf32> to vector<1x1x4xf32>
      tpu.vector_store %arg4[%c0_26, %c2, %c0_27], %33 {strides = array<i32>} : memref<1x3x4xf32, #tpu.memory_space<vmem>>, vector<1x1x4xf32>,
    } else {
    }
    return
  }
  func.func @transform_0(%arg0: i32, %arg1: i32, %arg2: i32) -> (i32, i32, i32) {
    %c0_i32 = arith.constant 0 : i32
    return %arg0, %arg1, %arg2 : i32, i32, i32
  }
  func.func @transform_1(%arg0: i32, %arg1: i32, %arg2: i32) -> (i32, i32, i32) {
    %c0_i32 = arith.constant 0 : i32
    %c0_i32_0 = arith.constant 0 : i32
    return %arg0, %c0_i32, %arg1 : i32, i32, i32
  }
}

</mosaic_0001>

<llo_original>
// kernel: tpu_custom_call.1
$region0: #{tpu_custom_call.1}
  #allocation0 [shape = 'u32[]', space=smem, size = 0x4, offset = 0x4, fixed_abs, tag = 'smem constant byte address 0x4 - core index']
  #allocation1 [shape = 'u32[144,128]{1,0:T(1,128)}', space=vmem, size = 0x12000, scoped, tag = 'internal scratch']
  #allocation2 [shape = 'f32[1,4]{1,0:T(1,128)}', space=vmem, size = 0x200, scoped, tag = 'scratch operand']
  #allocation3 [shape = 'f32[1,4]{1,0:T(1,128)}', space=vmem, size = 0x200, scoped, tag = 'scratch operand']
  %s0 = inlined_call_operand.hbm [shape: f32[2,4,16], index: 0, kind: input, shape index: {}]
  %s1 = inlined_call_operand.vmem [shape: f32[2,3,4], index: 1, kind: output, shape index: {}]
  %s2 = sld [smem:[#allocation0]]
  $region49: #{tpu_custom_call.1} parent=0
    _
  %s4 = ssub.s32 1, %s2
  %s5 = scalar_select 0, %s4, %s2
  $region1: #{tpu_custom_call.1} parent=0
    #allocation4 [shape = 'u8[4096]{0}', space=vmem, size = 0x1000, scoped, tag = 'input window, operand 0']
    #allocation5 [shape = 's32[2]{0}', space=sflag, size = 0x8, scoped, tag = 'scoped memory for tpu_custom_call.1']
    %6 = vsyncpa [#allocation5], 0
    %s7 = scalar_lea.sflag [#allocation5], 1
    %8 = vsyncpa %s7, 0
    loop: start=0, step=1, limit=4
    $region2: #{tpu_custom_call.1} parent=1 // loop_pre_header
      _
    $region3: #{tpu_custom_call.1} parent=1 // loop_header
      %s10 = sphi 0, %s14
      %p11 = scmp.ge.s32.totalorder %s10, 4
      %s17 = sphi 0, %s36
      %s18 = sphi 0, %s32
      %s19 = sphi 0, %s28
      %s20 = sphi 0, %s17
      %s21 = sphi 0, %s18
      %s22 = sphi 0, %s19
      %s23 = sphi 0, %s20
      %s24 = sphi 0, %s21
      %s25 = sphi 0, %s22
      %s43 = sphi 0, %s45
      %s46 = sphi 0, %s43
      %s47 = sphi 0, %s46
      %s63 = sphi 0, %s47
      %s71 = sphi 0, %s73
      %s74 = sphi 0, %s71
      %s75 = sphi 0, %s74
      %s91 = sphi 0, %s75
    $region4: #{tpu_custom_call.1} parent=1 // loop_header_branch
      %13 = sbr.rel (%p11) target = $region8
    $region5: #{tpu_custom_call.1} parent=1 // loop_body
      %s15 = ssub.s32 %s10, 1
      %s16 = ssub.s32 %s10, 2
      %s26 = sadd.s32 1, %s19
      %p27 = scmp.ge.s32.totalorder %s26, 1
      %s28 = scalar_select %p27, 0, %s26
      %s29 = sadd.s32 1, %s18
      %s30 = scalar_select %p27, %s29, %s18
      %p31 = scmp.ge.s32.totalorder %s30, 1
      %s32 = scalar_select %p31, 0, %s30
      %s33 = sadd.s32 1, %s17
      %s34 = scalar_select %p31, %s33, %s17
      %p35 = scmp.ge.s32.totalorder %s34, 2
      %s36 = scalar_select %p35, 0, %s34
      %s37 = ssub.s32 %s17, %s36
      %s38 = ssub.s32 %s18, %s32
      %s39 = sor.u32 %s37, %s38
      %s40 = ssub.s32 %s19, %s28
      %s41 = sor.u32 %s39, %s40
      %p42 = scmp.eq.s32.totalorder %s41, 0
      %s44 = sadd.s32 %s43, 1
      %s45 = scalar_select %p42, %s43, %s44
      %p48 = pneg %p42
      %p49 = scmp.eq.s32.totalorder %s10, 1
      %p50 = por %p48, %p49
      %p51 = scmp.ne.s32.totalorder %s43, %s46
      %p52 = scmp.eq.s32.totalorder %s10, 0
      %p53 = por %p51, %p52
      %p54 = scmp.ne.s32.totalorder %s43, %s46
      %p55 = scmp.eq.s32.totalorder %s15, 1
      %p56 = por %p54, %p55
      %p57 = scmp.ne.s32.totalorder %s46, %s47
      %p58 = scmp.eq.s32.totalorder %s15, 0
      %p59 = por %p57, %p58
      %p60 = scmp.ne.s32.totalorder %s46, %s47
      %p61 = scmp.eq.s32.totalorder %s16, 1
      %p62 = por %p60, %p61
      %p64 = scmp.ne.s32.totalorder %s47, %s63
      %p65 = scmp.eq.s32.totalorder %s16, 0
      %p66 = por %p64, %p65
      %s67 = ssub.s32 %s17, %s36
      %s68 = ssub.s32 %s18, %s32
      %s69 = sor.u32 %s67, %s68
      %p70 = scmp.eq.s32.totalorder %s69, 0
      %s72 = sadd.s32 %s71, 1
      %s73 = scalar_select %p70, %s71, %s72
      %p76 = pneg %p70
      %p77 = scmp.eq.s32.totalorder %s10, 1
      %p78 = por %p76, %p77
      %p79 = scmp.ne.s32.totalorder %s71, %s74
      %p80 = scmp.eq.s32.totalorder %s10, 0
      %p81 = por %p79, %p80
      %p82 = scmp.ne.s32.totalorder %s71, %s74
      %p83 = scmp.eq.s32.totalorder %s15, 1
      %p84 = por %p82, %p83
      %p85 = scmp.ne.s32.totalorder %s74, %s75
      %p86 = scmp.eq.s32.totalorder %s15, 0
      %p87 = por %p85, %p86
      %p88 = scmp.ne.s32.totalorder %s74, %s75
      %p89 = scmp.eq.s32.totalorder %s16, 1
      %p90 = por %p88, %p89
      %p92 = scmp.ne.s32.totalorder %s75, %s91
      %p93 = scmp.eq.s32.totalorder %s16, 0
      %p94 = por %p92, %p93
      %p95 = scmp.le.s32.totalorder 1, %s10
      %p96 = scmp.lt.s32.totalorder %s10, 3
      %p97 = pnand %p95, %p96
      %p98 = pneg %p97
      // Predicated region
      $region9: #{tpu_custom_call.1} parent=5 // pred_check
        _
      $region10: #{tpu_custom_call.1} parent=5 // pred_check_branch
        %100 = sbr.rel (%p97) target = $region12
      $region11: #{tpu_custom_call.1} parent=5 // pred_region
        %s101 = ssub.s32 %s10, 1
      $region12: #{tpu_custom_call.1} parent=5 // pred_fallthru
        _
      %p102 = scmp.lt.s32.totalorder %s10, 2
      // Predicated region
      $region13: #{tpu_custom_call.1} parent=5 // pred_check
        %p103 = pneg %p102
      $region14: #{tpu_custom_call.1} parent=5 // pred_check_branch
        %105 = sbr.rel (%p103) target = $region16
      $region15: #{tpu_custom_call.1} parent=5 // pred_region
        // Predicated region
        $region17: #{tpu_custom_call.1} parent=15 // pred_check
          %p106 = pneg %p53
        $region18: #{tpu_custom_call.1} parent=15 // pred_check_branch
          %108 = sbr.rel (%p106) target = $region20
        $region19: #{tpu_custom_call.1} parent=15 // pred_region
          %s109 = sand.u32 %s43, 1
          %s110 = scalar_lea.sflag [#allocation5], %s109
          %s111 = sand.u32 %s43, 1
          %s112 = smul.addr %s111, 4
          %s113 = scalar_lea.vmem [#allocation4], %s112
          %s115 = ssub.s32 64, 64
          %116 = vsyncadd %s110, %s115
          %s117 = sadd.s32 %s19, %s18
          %s118 = sadd.s32 %s117, %s17
          %s119 = smul.addr %s118, 64
          %s120 = scalar_lea.hbm %s0, %s119
          %s122 = sshll.u32 %s113, 4
          %s123 = int_to_ptr.vmem [resolvable:$true] %s122
          %125 = dma.hbm_to_vmem [thread:$0]  %s120, 64, %s123, %s110
        $region20: #{tpu_custom_call.1} parent=15 // pred_fallthru
          _
      $region16: #{tpu_custom_call.1} parent=5 // pred_fallthru
        _
      %p126 = scmp.le.s32.totalorder 1, %s10
      %p127 = scmp.lt.s32.totalorder %s10, 3
      %p128 = pnand %p126, %p127
      %p129 = pneg %p128
      // Predicated region
      $region21: #{tpu_custom_call.1} parent=5 // pred_check
        _
      $region22: #{tpu_custom_call.1} parent=5 // pred_check_branch
        %131 = sbr.rel (%p128) target = $region24
      $region23: #{tpu_custom_call.1} parent=5 // pred_region
        %s132 = ssub.s32 %s10, 1
        %s133 = sand.u32 %s46, 1
        %s134 = scalar_lea.sflag [#allocation5], %s133
        %s135 = sand.u32 %s46, 1
        %s136 = smul.addr %s135, 4
        %s137 = scalar_lea.vmem [#allocation4], %s136
        // Predicated region
        $region25: #{tpu_custom_call.1} parent=23 // pred_check
          %p138 = pneg %p59
        $region26: #{tpu_custom_call.1} parent=23 // pred_check_branch
          %140 = sbr.rel (%p138) target = $region28
        $region27: #{tpu_custom_call.1} parent=23 // pred_region
          %141 = dma.done %s134, 64
        $region28: #{tpu_custom_call.1} parent=23 // pred_fallthru
          _
        %s142 = sand.u32 %s46, 1
        %s143 = scalar_lea.sflag [#allocation5], %s142
        %s144 = sand.u32 %s46, 1
        %s145 = smul.addr %s144, 4
        %s146 = scalar_lea.vmem [#allocation4], %s145
        %p147 = pneg %p59
        %p148 = pneg %p56
        %p149 = pneg %p87
        %p150 = pneg %p84
        %p151 = scmp.lt.s32.totalorder %s20, 1
        %s152 = scalar_select %p151, %s20, 1
        %p153 = scmp.lt.s32.totalorder %s21, 0
        %s154 = scalar_select %p153, %s21, 0
        %s155 = sadd.s32 %s154, %s152
        %s156 = smul.addr %s155, 4
        %s157 = scalar_lea.vmem %s1, %s156
        %p158 = scmp.lt.s32.totalorder %s20, 1
        %s159 = scalar_select %p158, %s20, 1
        %p160 = scmp.lt.s32.totalorder %s21, 0
        %s161 = scalar_select %p160, %s21, 0
        %s162 = sadd.s32 %s161, %s159
        %s163 = smul.addr %s162, 4
        %s164 = scalar_lea.vmem %s1, %s163
        %p165 = scmp.eq.s32.totalorder %s22, 0
        // Predicated region
        $region29: #{tpu_custom_call.1} parent=23 // pred_check
          %p166 = pneg %p165
        $region30: #{tpu_custom_call.1} parent=23 // pred_check_branch
          %168 = sbr.rel (%p166) target = $region32
        $region31: #{tpu_custom_call.1} parent=23 // pred_region
          %vm169 = vcmask 24576
          %170 = vst.msk [vmem:[#allocation2] sm:$0x1] %vm169, 0.0
          %171 = vst.msk [vmem:[#allocation3] sm:$0x1] %vm169, -inf
        $region32: #{tpu_custom_call.1} parent=23 // pred_fallthru
          _
        %v172 = vld [vmem:[%s137] sm:$0xf]
        %v173 = vld [vmem:[#allocation2] sm:$0x1]
        %vm174 = vcmask 125952
        %v175 = vsel %vm174, %v172, 0.0
        %176 = vadd.xlane.f32.xlu0 %v175
        %v177 = vpop.xlane.xlu0 %176
        %v179 = vlaneseq
        %v180 = vshrl.u32 %v179, 7
        %v181 = vsub.s32 0, %v180
        %v182 = vrot.slane %v177, %v181
        %v183 = vlaneseq
        %v184 = vshrl.u32 %v183, 7
        %v185 = vsub.s32 1, %v184
        %v186 = vrot.slane %v177, %v185
        %v187 = vlaneseq
        %v188 = vshrl.u32 %v187, 7
        %v189 = vsub.s32 2, %v188
        %v190 = vrot.slane %v177, %v189
        %v191 = vlaneseq
        %v192 = vshrl.u32 %v191, 7
        %v193 = vsub.s32 3, %v192
        %v194 = vrot.slane %v177, %v193
        %v195 = vcombine.low %v182, %v186
        %v196 = vcombine.low %v190, %v194
        %v198 = vunpack.c.l.s4 1966171168
        %v199 = vunpack.c.0.s8 %v198
        %v200 = vlaneseq
        %v201 = vshrl.u32 %v200, 7
        %v202 = vsub.s32 %v199, %v201
        %v203 = vrot.slane %v195, %v202
        %v205 = vunpack.c.l.s4 1966171168
        %v206 = vunpack.c.0.s8 %v205
        %v207 = vlaneseq
        %v208 = vshrl.u32 %v207, 7
        %v209 = vsub.s32 %v206, %v208
        %v210 = vrot.slane %v196, %v209
        %v211 = vcombine.low %v203, %v210
        %v213 = vunpack.c.l.s4 1966171168
        %v214 = vunpack.c.0.s8 %v213
        %v215 = vlaneseq
        %v216 = vshrl.u32 %v215, 7
        %v217 = vsub.s32 %v214, %v216
        %v218 = vrot.slane %v211, %v217
        %219 = vset.pattern.permute.xlu0 0
        %220 = vperm.xlu0 %219, %v218
        %v221 = vpop.permute.xlu0 %220
        %v222 = vlaneseq
        %v223 = vand.u32 %v222, 127
        %v224 = vlaneseq
        %v225 = vshrl.u32 %v224, 7
        %v226 = vsub.s32 %v223, %v225
        %v227 = vrot.slane %v221, %v226
        %v229 = vunpack.c.l.s4 1966171168
        %v230 = vunpack.c.0.s8 %v229
        %v231 = vlaneseq
        %v232 = vshrl.u32 %v231, 7
        %v233 = vsub.s32 %v230, %v232
        %v234 = vrot.slane %v227, %v233
        %v236 = vunpack.c.l.s4 1966171168
        %v237 = vunpack.c.0.s8 %v236
        %v238 = vlaneseq
        %v239 = vshrl.u32 %v238, 7
        %v240 = vsub.s32 %v237, %v239
        %v241 = vrot.slane %v234, %v240
        %v243 = vadd.f32 %v173, %v241
        %vm244 = vcmask 24576
        %245 = vst.msk [vmem:[#allocation2] sm:$0x1] %vm244, %v243
        %v246 = vld [vmem:[#allocation3] sm:$0x1]
        %v247 = vsel %vm174, %v172, -inf
        %248 = vmax.xlane.f32.xlu0 %v247
        %v249 = vpop.xlane.xlu0 %248
        %v251 = vlaneseq
        %v252 = vshrl.u32 %v251, 7
        %v253 = vsub.s32 0, %v252
        %v254 = vrot.slane %v249, %v253
        %v255 = vlaneseq
        %v256 = vshrl.u32 %v255, 7
        %v257 = vsub.s32 1, %v256
        %v258 = vrot.slane %v249, %v257
        %v259 = vlaneseq
        %v260 = vshrl.u32 %v259, 7
        %v261 = vsub.s32 2, %v260
        %v262 = vrot.slane %v249, %v261
        %v263 = vlaneseq
        %v264 = vshrl.u32 %v263, 7
        %v265 = vsub.s32 3, %v264
        %v266 = vrot.slane %v249, %v265
        %v267 = vcombine.low %v254, %v258
        %v268 = vcombine.low %v262, %v266
        %v270 = vunpack.c.l.s4 1966171168
        %v271 = vunpack.c.0.s8 %v270
        %v272 = vlaneseq
        %v273 = vshrl.u32 %v272, 7
        %v274 = vsub.s32 %v271, %v273
        %v275 = vrot.slane %v267, %v274
        %v277 = vunpack.c.l.s4 1966171168
        %v278 = vunpack.c.0.s8 %v277
        %v279 = vlaneseq
        %v280 = vshrl.u32 %v279, 7
        %v281 = vsub.s32 %v278, %v280
        %v282 = vrot.slane %v268, %v281
        %v283 = vcombine.low %v275, %v282
        %v285 = vunpack.c.l.s4 1966171168
        %v286 = vunpack.c.0.s8 %v285
        %v287 = vlaneseq
        %v288 = vshrl.u32 %v287, 7
        %v289 = vsub.s32 %v286, %v288
        %v290 = vrot.slane %v283, %v289
        %291 = vset.pattern.permute.xlu0 0
        %292 = vperm.xlu0 %291, %v290
        %v293 = vpop.permute.xlu0 %292
        %v294 = vlaneseq
        %v295 = vshrl.u32 %v294, 7
        %v296 = vsub.s32 %v223, %v295
        %v297 = vrot.slane %v293, %v296
        %v299 = vunpack.c.l.s4 1966171168
        %v300 = vunpack.c.0.s8 %v299
        %v301 = vlaneseq
        %v302 = vshrl.u32 %v301, 7
        %v303 = vsub.s32 %v300, %v302
        %v304 = vrot.slane %v297, %v303
        %v306 = vunpack.c.l.s4 1966171168
        %v307 = vunpack.c.0.s8 %v306
        %v308 = vlaneseq
        %v309 = vshrl.u32 %v308, 7
        %v310 = vsub.s32 %v307, %v309
        %v311 = vrot.slane %v304, %v310
        %v313 = vmax.f32 %v246, %v311
        %314 = vst.msk [vmem:[#allocation3] sm:$0x1] %vm244, %v313
        // Predicated region
        $region33: #{tpu_custom_call.1} parent=23 // pred_check
          %p315 = pneg %p165
        $region34: #{tpu_custom_call.1} parent=23 // pred_check_branch
          %317 = sbr.rel (%p315) target = $region36
        $region35: #{tpu_custom_call.1} parent=23 // pred_region
          %vm318 = vcmp.eq.s32.totalorder %v223, 15
          %v319 = vsel %vm318, %v172, -inf
          %v320 = vsel %vm174, %v319, -inf
          %321 = vmax.xlane.f32.xlu0 %v320
          %v322 = vpop.xlane.xlu0 %321
          %v323 = vld [vmem:[#allocation2] sm:$0x1]
          %v324 = vmul.f32 %v323, 0.0625
          %325 = vst.msk [vmem:[%s164] sm:$0x1] %vm244, %v324
          %v326 = vld [vmem:[#allocation3] sm:$0x1]
          %327 = vst.msk [vmem:[%s164 + $0x1] sm:$0x1] %vm244, %v326
          %v329 = vlaneseq
          %v330 = vshrl.u32 %v329, 7
          %v331 = vsub.s32 %v223, %v330
          %v332 = vrot.slane %v322, %v331
          %334 = vst.msk [vmem:[%s164 + $0x2] sm:$0x1] %vm244, %v332
        $region36: #{tpu_custom_call.1} parent=23 // pred_fallthru
          _
        %p335 = scmp.lt.s32.totalorder %s20, 1
        %s336 = scalar_select %p335, %s20, 1
        %p337 = scmp.lt.s32.totalorder %s21, 0
        %s338 = scalar_select %p337, %s21, 0
        %s339 = sadd.s32 %s338, %s336
        %s340 = smul.addr %s339, 4
        %s341 = scalar_lea.vmem %s1, %s340
        // Predicated region
        $region37: #{tpu_custom_call.1} parent=23 // pred_check
          %p342 = pneg %p84
        $region38: #{tpu_custom_call.1} parent=23 // pred_check_branch
          %344 = sbr.rel (%p342) target = $region40
        $region39: #{tpu_custom_call.1} parent=23 // pred_region
          _
        $region40: #{tpu_custom_call.1} parent=23 // pred_fallthru
          _
      $region24: #{tpu_custom_call.1} parent=5 // pred_fallthru
        _
      %p345 = scmp.le.s32.totalorder 2, %s10
      // Predicated region
      $region41: #{tpu_custom_call.1} parent=5 // pred_check
        %p346 = pneg %p345
      $region42: #{tpu_custom_call.1} parent=5 // pred_check_branch
        %348 = sbr.rel (%p346) target = $region44
      $region43: #{tpu_custom_call.1} parent=5 // pred_region
        %s349 = ssub.s32 %s10, 2
        // Predicated region
        $region45: #{tpu_custom_call.1} parent=43 // pred_check
          %p350 = pneg %p90
        $region46: #{tpu_custom_call.1} parent=43 // pred_check_branch
          %352 = sbr.rel (%p350) target = $region48
        $region47: #{tpu_custom_call.1} parent=43 // pred_region
          %p353 = scmp.lt.s32.totalorder %s23, 1
          %s354 = scalar_select %p353, %s23, 1
          %p355 = scmp.lt.s32.totalorder %s24, 0
          %s356 = scalar_select %p355, %s24, 0
          %s357 = sadd.s32 %s356, %s354
          %s358 = smul.addr %s357, 4
          %s359 = scalar_lea.vmem %s1, %s358
        $region48: #{tpu_custom_call.1} parent=43 // pred_fallthru
          _
      $region44: #{tpu_custom_call.1} parent=5 // pred_fallthru
        _
    $region6: #{tpu_custom_call.1} parent=1 // loop_footer
      %s14 = sadd.s32 1, %s10
    $region7: #{tpu_custom_call.1} parent=1 // loop_footer_branch
      %9 = sbr.rel target = $region3
    $region8: #{tpu_custom_call.1} parent=1 // loop_exit
      _
    %360 = vsyncpa [#allocation5], 1
    %s361 = scalar_lea.sflag [#allocation5], 1
    %362 = vsyncpa %s361, 1

</llo_original>
